<compile_context>
chip_gen: v6e
topology: v6e:2x2x1
jax: 0.10.0
libtpu: 0.0.40
codegen_flags: <defaults>
</compile_context>

<pallas_src>
import functools

import jax
import jax.numpy as jnp
from jax.experimental import pallas as pl
from jax.experimental.pallas import tpu as pltpu


def _round_up(n: int, m: int) -> int:
    return ((n + m - 1) // m) * m


def mlp_kernel(x_ref, w1_ref, b1_ref, w2_ref, b2_ref, o_ref):
    """Fused 2-layer MLP tile: f32 MXU matmuls, f32 bias/ReLU."""
    # Layer 1: [tile_b, in] @ [in, hid] -> f32.
    h = jnp.dot(x_ref[...], w1_ref[...], preferred_element_type=jnp.float32)
    h = jnp.maximum(h + b1_ref[...], 0.0)        # f32 bias + ReLU (VPU)
    # Layer 2: [tile_b, hid] @ [hid, out] -> f32.
    y = jnp.dot(h, w2_ref[...], preferred_element_type=jnp.float32)
    o_ref[...] = (y + b2_ref[...]).astype(o_ref.dtype)


@functools.partial(jax.jit, static_argnames=("tile_b",))
def pallas_ann_forward(x, w1, b1, w2, b2, *, tile_b=4096):
    """Forward pass.

    x : [B, in]      (features on the lane axis)
    w1: [in, hid]    (transposed vs. PyTorch nn.Linear storage)
    b1: [1, hid]
    w2: [hid, out]
    b2: [1, out]
    Returns f32 [B, out].
    """
    B, in_dim = x.shape
    hid = w1.shape[1]
    out_dim = w2.shape[1]

    # --- batch tiling --------------------------------------------------------
    b8 = _round_up(B, 8)
    # Cap the tile so the grid has >= 2 steps whenever the batch allows it
    # (v7x dual-TC sharding + double-buffered DMA overlap); otherwise keep tiles
    # as large as possible to amortize per-grid-step overhead.
    tile_b = max(8, min(tile_b, _round_up(pl.cdiv(b8, 2), 8)))
    n_tiles = pl.cdiv(b8, tile_b)
    B_p = n_tiles * tile_b

    # Cheap zero-row pad only when needed (feature dim stays unpadded).
    x_in = x if B_p == B else jnp.pad(x, ((0, B_p - B), (0, 0)))

    out = pl.pallas_call(
        mlp_kernel,
        out_shape=jax.ShapeDtypeStruct((B_p, out_dim), jnp.float32),
        grid=(n_tiles,),
        in_specs=[
            # X: one batch tile per grid step (pipelined DMA). Trailing dim
            # equals the full array dim (in_dim), so no lane padding is needed.
            pl.BlockSpec((tile_b, in_dim), lambda i: (i, 0)),
            # Weights / biases: resident in VMEM across all grid steps,
            # all unpadded (trailing dims equal full array dims).
            pl.BlockSpec((in_dim, hid), lambda i: (0, 0)),
            pl.BlockSpec((1, hid), lambda i: (0, 0)),
            pl.BlockSpec((hid, out_dim), lambda i: (0, 0)),
            pl.BlockSpec((1, out_dim), lambda i: (0, 0)),
        ],
        # Output block's trailing dim equals the full array dim -> no padding,
        # no post-kernel column slice.
        out_specs=pl.BlockSpec((tile_b, out_dim), lambda i: (i, 0)),
        compiler_params=pltpu.CompilerParams(
            dimension_semantics=("parallel",)),   # megacore-shardable batch axis
    )(x_in, w1, b1, w2, b2)

    return out if B_p == B else out[:B]


def init_params(key, input_size, hidden_size, output_size):
    """Deterministic init mimicking nn.Linear default U(-1/sqrt(fan_in), 1/sqrt(fan_in))."""
    k1, k2, k3, k4 = jax.random.split(key, 4)
    bound1 = 1.0 / jnp.sqrt(input_size)
    bound2 = 1.0 / jnp.sqrt(hidden_size)
    w1 = jax.random.uniform(k1, (input_size, hidden_size), jnp.float32, -bound1, bound1)
    b1 = jax.random.uniform(k2, (1, hidden_size), jnp.float32, -bound1, bound1)
    w2 = jax.random.uniform(k3, (hidden_size, output_size), jnp.float32, -bound2, bound2)
    b2 = jax.random.uniform(k4, (1, output_size), jnp.float32, -bound2, bound2)
    return w1, b1, w2, b2


def _reference(x, w1, b1, w2, b2):
    return jnp.maximum(x @ w1 + b1, 0.0) @ w2 + b2


if __name__ == "__main__":
    # Shapes consistent with the module: PyTorchANN(input_size=20, hidden_size=32, output_size=10)
    batch, input_size, hidden_size, output_size = 8, 20, 32, 10

    key = jax.random.PRNGKey(0)
    kx, kp = jax.random.split(key)
    x = jax.random.normal(kx, (batch, input_size), dtype=jnp.float32)
    w1, b1, w2, b2 = init_params(kp, input_size, hidden_size, output_size)

    out = jax.block_until_ready(pallas_ann_forward(x, w1, b1, w2, b2))
    assert out.shape == (batch, output_size)
    ref = _reference(x, w1, b1, w2, b2)
    assert jnp.allclose(out, ref, atol=1e-2, rtol=1e-2), "mismatch vs f32 reference"

    # Larger batch exercises the multi-step (>=2) pipelined / dual-TC grid path.
    big_b = 4096
    x_big = jax.random.normal(jax.random.PRNGKey(1), (big_b, input_size), jnp.float32)
    out_big = jax.block_until_ready(pallas_ann_forward(x_big, w1, b1, w2, b2))
    ref_big = _reference(x_big, w1, b1, w2, b2)
    assert out_big.shape == (big_b, output_size)
    assert jnp.allclose(out_big, ref_big, atol=1e-2, rtol=1e-2), "mismatch (big batch)"

    print("KERNEL_OK")
</pallas_src>

<mosaic_0001>
module attributes {stable_mosaic.version = 11 : i64} {
  func.func @mlp_kernel(%arg0: i32, %arg1: memref<8x20xf32, #tpu.memory_space<vmem>>, %arg2: memref<20x32xf32, #tpu.memory_space<vmem>>, %arg3: memref<1x32xf32, #tpu.memory_space<vmem>>, %arg4: memref<32x10xf32, #tpu.memory_space<vmem>>, %arg5: memref<1x10xf32, #tpu.memory_space<vmem>>, %arg6: memref<8x10xf32, #tpu.memory_space<vmem>>) attributes {dimension_semantics = [#tpu.dimension_semantics<parallel>], iteration_bounds = array<i64: 1>, scalar_prefetch = 0 : i64, scratch_operands = 0 : i64, tpu.core_type = #tpu.core_type<tc>, window_params = [{transform_indices = @transform_0, window_bounds = array<i64: 8, 20>}, {pipeline_mode = #tpu.pipeline_mode<synchronous>, transform_indices = @transform_1, window_bounds = array<i64: 20, 32>}, {pipeline_mode = #tpu.pipeline_mode<synchronous>, transform_indices = @transform_2, window_bounds = array<i64: 1, 32>}, {pipeline_mode = #tpu.pipeline_mode<synchronous>, transform_indices = @transform_3, window_bounds = array<i64: 32, 10>}, {pipeline_mode = #tpu.pipeline_mode<synchronous>, transform_indices = @transform_4, window_bounds = array<i64: 1, 10>}, {transform_indices = @transform_5, window_bounds = array<i64: 8, 10>}]} {
    %c0 = arith.constant 0 : index
    %c0_0 = arith.constant 0 : index
    %0 = vector.load %arg1[%c0, %c0_0] : memref<8x20xf32, #tpu.memory_space<vmem>>, vector<8x20xf32>
    %c0_1 = arith.constant 0 : index
    %c0_2 = arith.constant 0 : index
    %1 = vector.load %arg2[%c0_1, %c0_2] : memref<20x32xf32, #tpu.memory_space<vmem>>, vector<20x32xf32>
    %cst = arith.constant dense<0.000000e+00> : vector<8x32xf32>
    %2 = tpu.matmul %0, %1, %cst {dimension_numbers = #tpu.dot_dimension_numbers<[1], [0], [0], [1], [0, 0, 1, 1], [], []>} : vector<8x20xf32>, vector<20x32xf32>, vector<8x32xf32> -> vector<8x32xf32>
    %c0_3 = arith.constant 0 : index
    %c0_4 = arith.constant 0 : index
    %3 = vector.load %arg3[%c0_3, %c0_4] : memref<1x32xf32, #tpu.memory_space<vmem>>, vector<1x32xf32>
    %4 = vector.broadcast %3 : vector<1x32xf32> to vector<8x32xf32>
    %5 = arith.addf %2, %4 : vector<8x32xf32>
    %cst_5 = arith.constant 0.000000e+00 : f32
    %6 = vector.broadcast %cst_5 : f32 to vector<8x32xf32>
    %7 = arith.maximumf %5, %6 : vector<8x32xf32>
    %c0_6 = arith.constant 0 : index
    %c0_7 = arith.constant 0 : index
    %8 = vector.load %arg4[%c0_6, %c0_7] : memref<32x10xf32, #tpu.memory_space<vmem>>, vector<32x10xf32>
    %cst_8 = arith.constant dense<0.000000e+00> : vector<8x10xf32>
    %9 = tpu.matmul %7, %8, %cst_8 {dimension_numbers = #tpu.dot_dimension_numbers<[1], [0], [0], [1], [0, 0, 1, 1], [], []>} : vector<8x32xf32>, vector<32x10xf32>, vector<8x10xf32> -> vector<8x10xf32>
    %c0_9 = arith.constant 0 : index
    %c0_10 = arith.constant 0 : index
    %10 = vector.load %arg5[%c0_9, %c0_10] : memref<1x10xf32, #tpu.memory_space<vmem>>, vector<1x10xf32>
    %11 = vector.broadcast %10 : vector<1x10xf32> to vector<8x10xf32>
    %12 = arith.addf %9, %11 : vector<8x10xf32>
    %c0_11 = arith.constant 0 : index
    %c0_12 = arith.constant 0 : index
    %13 = vector.load %arg6[%c0_11, %c0_12] : memref<8x10xf32, #tpu.memory_space<vmem>>, vector<8x10xf32>
    tpu.vector_store %arg6[%c0_11, %c0_12], %12 {strides = array<i32>} : memref<8x10xf32, #tpu.memory_space<vmem>>, vector<8x10xf32>,
    return
  }
  func.func @transform_0(%arg0: i32) -> (i32, i32) {
    %c0_i32 = arith.constant 0 : i32
    %c0_i32_0 = arith.constant 0 : i32
    return %arg0, %c0_i32 : i32, i32
  }
  func.func @transform_1(%arg0: i32) -> (i32, i32) {
    %c0_i32 = arith.constant 0 : i32
    %c0_i32_0 = arith.constant 0 : i32
    %c0_i32_1 = arith.constant 0 : i32
    return %c0_i32, %c0_i32_0 : i32, i32
  }
  func.func @transform_2(%arg0: i32) -> (i32, i32) {
    %c0_i32 = arith.constant 0 : i32
    %c0_i32_0 = arith.constant 0 : i32
    %c0_i32_1 = arith.constant 0 : i32
    return %c0_i32, %c0_i32_0 : i32, i32
  }
  func.func @transform_3(%arg0: i32) -> (i32, i32) {
    %c0_i32 = arith.constant 0 : i32
    %c0_i32_0 = arith.constant 0 : i32
    %c0_i32_1 = arith.constant 0 : i32
    return %c0_i32, %c0_i32_0 : i32, i32
  }
  func.func @transform_4(%arg0: i32) -> (i32, i32) {
    %c0_i32 = arith.constant 0 : i32
    %c0_i32_0 = arith.constant 0 : i32
    %c0_i32_1 = arith.constant 0 : i32
    return %c0_i32, %c0_i32_0 : i32, i32
  }
  func.func @transform_5(%arg0: i32) -> (i32, i32) {
    %c0_i32 = arith.constant 0 : i32
    %c0_i32_0 = arith.constant 0 : i32
    return %arg0, %c0_i32 : i32, i32
  }
}

</mosaic_0001>

<llo_original>
// kernel: pallas_ann_forward.1
$region0: #{pallas_ann_forward.1}
  #allocation0 [shape = 'u32[]', space=smem, size = 0x4, offset = 0x4, fixed_abs, tag = 'smem constant byte address 0x4 - core index']
  #allocation1 [shape = 'u32[144,128]{1,0:T(1,128)}', space=vmem, size = 0x12000, scoped, tag = 'internal scratch']
  %s0 = inlined_call_operand.vmem [shape: f32[8,20], index: 0, kind: input, shape index: {}]
  %s1 = inlined_call_operand.vmem [shape: f32[20,32], index: 1, kind: input, shape index: {}]
  %s2 = inlined_call_operand.vmem [shape: f32[1,32], index: 2, kind: input, shape index: {}]
  %s3 = inlined_call_operand.vmem [shape: f32[32,10], index: 3, kind: input, shape index: {}]
  %s4 = inlined_call_operand.vmem [shape: f32[1,10], index: 4, kind: input, shape index: {}]
  %s5 = inlined_call_operand.hbm [shape: f32[8,10], index: 5, kind: output, shape index: {}]
  %s6 = sld [smem:[#allocation0]]
  $region30: #{pallas_ann_forward.1} parent=0
    _
  %s8 = ssub.s32 1, %s6
  %s9 = scalar_select 0, %s8, %s6
  $region1: #{pallas_ann_forward.1} parent=0
    #allocation2 [shape = 'u8[4096]{0}', space=vmem, size = 0x1000, scoped, tag = 'output window, operand 0, single buffered']
    #allocation3 [shape = 's32[1]{0}', space=sflag, size = 0x4, scoped, tag = 'scoped memory for pallas_ann_forward.1']
    %10 = vsyncpa [#allocation3], 0
    // Predicated region
    $region2: #{pallas_ann_forward.1} parent=1 // pred_check
      _
    $region3: #{pallas_ann_forward.1} parent=1 // pred_check_branch
      %12 = sbr.rel (0) target = $region5
    $region4: #{pallas_ann_forward.1} parent=1 // pred_region
      _
    $region5: #{pallas_ann_forward.1} parent=1 // pred_fallthru
      _
    // Predicated region
    $region6: #{pallas_ann_forward.1} parent=1 // pred_check
      _
    $region7: #{pallas_ann_forward.1} parent=1 // pred_check_branch
      %14 = sbr.rel (0) target = $region9
    $region8: #{pallas_ann_forward.1} parent=1 // pred_region
      _
    $region9: #{pallas_ann_forward.1} parent=1 // pred_fallthru
      _
    // Predicated region
    $region10: #{pallas_ann_forward.1} parent=1 // pred_check
      _
    $region11: #{pallas_ann_forward.1} parent=1 // pred_check_branch
      %16 = sbr.rel (0) target = $region13
    $region12: #{pallas_ann_forward.1} parent=1 // pred_region
      _
    $region13: #{pallas_ann_forward.1} parent=1 // pred_fallthru
      _
    // Predicated region
    $region14: #{pallas_ann_forward.1} parent=1 // pred_check
      _
    $region15: #{pallas_ann_forward.1} parent=1 // pred_check_branch
      %18 = sbr.rel (0) target = $region17
    $region16: #{pallas_ann_forward.1} parent=1 // pred_region
      _
    $region17: #{pallas_ann_forward.1} parent=1 // pred_fallthru
      _
    // Predicated region
    $region18: #{pallas_ann_forward.1} parent=1 // pred_check
      _
    $region19: #{pallas_ann_forward.1} parent=1 // pred_check_branch
      %20 = sbr.rel (0) target = $region21
    $region20: #{pallas_ann_forward.1} parent=1 // pred_region
      _
    $region21: #{pallas_ann_forward.1} parent=1 // pred_fallthru
      _
    %v21 = vld [vmem:[%s0] sm:$0xff]
    %v22 = vld [vmem:[%s1] sm:$0xff]
    %v23 = vld [vmem:[%s1 + $0x8] sm:$0xff]
    %v24 = vld [vmem:[%s1 + $0x10] sm:$0xf]
    %v25 = vld [vmem:[%s2] sm:$0x1]
    %v27 = vlaneseq
    %v28 = vshrl.u32 %v27, 7
    %v29 = vsub.s32 0, %v28
    %v30 = vrot.slane %v25, %v29
    %vm32 = vcmask 162816
    %v34 = vsel %vm32, %v21, 0
    %vm36 = vcmask 1043456
    %v38 = vsel %vm36, %v24, 0
    %40 = vmatprep.subr.mxu0 0.0
    %41 = vmatpush1.msra.mxu0 0.0
    %42 = vmatprep.subr.mxu0 0.0
    %43 = vmatpush1.msra.mxu0 0.0
    %44 = vmatprep.subr.mxu0 0.0
    %45 = vmatpush1.msra.mxu0 0.0
    %46 = vmatprep.subr.mxu0 0.0
    %47 = vmatpush1.msra.mxu0 0.0
    %48 = vmatprep.subr.mxu0 0.0
    %49 = vmatpush1.msra.mxu0 0.0
    %50 = vmatprep.subr.mxu0 0.0
    %51 = vmatpush1.msra.mxu0 0.0
    %52 = vmatprep.subr.mxu0 0.0
    %53 = vmatpush1.msra.mxu0 0.0
    %54 = vmatprep.subr.mxu0 0.0
    %55 = vmatpush1.msra.mxu0 0.0
    %56 = vmatprep.subr.mxu0 0.0
    %57 = vmatpush1.msra.mxu0 0.0
    %58 = vmatprep.subr.mxu0 0.0
    %59 = vmatpush1.msra.mxu0 0.0
    %60 = vmatprep.subr.mxu0 0.0
    %61 = vmatpush1.msra.mxu0 0.0
    %62 = vmatprep.subr.mxu0 0.0
    %63 = vmatpush1.msra.mxu0 0.0
    %64 = vmatprep.subr.mxu0 0.0
    %65 = vmatpush1.msra.mxu0 0.0
    %66 = vmatprep.subr.mxu0 0.0
    %67 = vmatpush1.msra.mxu0 %v38
    %68 = vmatprep.subr.mxu0 0.0
    %69 = vmatpush1.msra.mxu0 %v23
    %70 = vmatprep.subr.mxu0 0.0
    %71 = vmatpush1.msra.mxu0 %v22
    %72 = vmatprep.subr.mxu0 0.0
    %73 = vmatpush2.msra.mxu0 0.0
    %74 = vmatprep.subr.mxu0 0.0
    %75 = vmatpush2.msra.mxu0 0.0
    %76 = vmatprep.subr.mxu0 0.0
    %77 = vmatpush2.msra.mxu0 0.0
    %78 = vmatprep.subr.mxu0 0.0
    %79 = vmatpush2.msra.mxu0 0.0
    %80 = vmatprep.subr.mxu0 0.0
    %81 = vmatpush2.msra.mxu0 0.0
    %82 = vmatprep.subr.mxu0 0.0
    %83 = vmatpush2.msra.mxu0 0.0
    %84 = vmatprep.subr.mxu0 0.0
    %85 = vmatpush2.msra.mxu0 0.0
    %86 = vmatprep.subr.mxu0 0.0
    %87 = vmatpush2.msra.mxu0 0.0
    %88 = vmatprep.subr.mxu0 0.0
    %89 = vmatpush2.msra.mxu0 0.0
    %90 = vmatprep.subr.mxu0 0.0
    %91 = vmatpush2.msra.mxu0 0.0
    %92 = vmatprep.subr.mxu0 0.0
    %93 = vmatpush2.msra.mxu0 0.0
    %94 = vmatprep.subr.mxu0 0.0
    %95 = vmatpush2.msra.mxu0 0.0
    %96 = vmatprep.subr.mxu0 0.0
    %97 = vmatpush2.msra.mxu0 0.0
    %98 = vmatprep.subr.mxu0 0.0
    %99 = vmatpush2.msra.mxu0 0.0
    %100 = vmatprep.subr.mxu0 0.0
    %101 = vmatpush2.msra.mxu0 0.0
    %102 = vmatprep.subr.mxu0 0.0
    %103 = vmatpush2.msra.mxu0 0.0
    %104 = vmatprep.mubr.f32.mxu0 0.0
    %105 = vmatmul.mubr.f32.gmra.mxu0 %v34
    %v106 = vpop.f32.mrf.mxu0
    %v107 = vadd.f32 %v30, %v106
    %v108 = vpop.f32.mrf.mxu0
    %109 = vdwg.mxu0
    %v110 = vmax.f32 %v107, 0.0
    %v111 = vld [vmem:[%s3] sm:$0xff]
    %v112 = vld [vmem:[%s3 + $0x8] sm:$0xff]
    %v113 = vld [vmem:[%s3 + $0x10] sm:$0xff]
    %v114 = vld [vmem:[%s3 + $0x18] sm:$0xff]
    %v115 = vld [vmem:[%s4] sm:$0x1]
    %v117 = vlaneseq
    %v118 = vshrl.u32 %v117, 7
    %v119 = vsub.s32 0, %v118
    %v120 = vrot.slane %v115, %v119
    %vm122 = vcmask 261120
    %v124 = vsel %vm122, %v110, 0
    %126 = vmatprep.subr.mxu0 0.0
    %127 = vmatpush1.msra.mxu0 0.0
    %128 = vmatprep.subr.mxu0 0.0
    %129 = vmatpush1.msra.mxu0 0.0
    %130 = vmatprep.subr.mxu0 0.0
    %131 = vmatpush1.msra.mxu0 0.0
    %132 = vmatprep.subr.mxu0 0.0
    %133 = vmatpush1.msra.mxu0 0.0
    %134 = vmatprep.subr.mxu0 0.0
    %135 = vmatpush1.msra.mxu0 0.0
    %136 = vmatprep.subr.mxu0 0.0
    %137 = vmatpush1.msra.mxu0 0.0
    %138 = vmatprep.subr.mxu0 0.0
    %139 = vmatpush1.msra.mxu0 0.0
    %140 = vmatprep.subr.mxu0 0.0
    %141 = vmatpush1.msra.mxu0 0.0
    %142 = vmatprep.subr.mxu0 0.0
    %143 = vmatpush1.msra.mxu0 0.0
    %144 = vmatprep.subr.mxu0 0.0
    %145 = vmatpush1.msra.mxu0 0.0
    %146 = vmatprep.subr.mxu0 0.0
    %147 = vmatpush1.msra.mxu0 0.0
    %148 = vmatprep.subr.mxu0 0.0
    %149 = vmatpush1.msra.mxu0 0.0
    %150 = vmatprep.subr.mxu0 0.0
    %151 = vmatpush1.msra.mxu0 %v114
    %152 = vmatprep.subr.mxu0 0.0
    %153 = vmatpush1.msra.mxu0 %v113
    %154 = vmatprep.subr.mxu0 0.0
    %155 = vmatpush1.msra.mxu0 %v112
    %156 = vmatprep.subr.mxu0 0.0
    %157 = vmatpush1.msra.mxu0 %v111
    %158 = vmatprep.subr.mxu0 0.0
    %159 = vmatpush2.msra.mxu0 0.0
    %160 = vmatprep.subr.mxu0 0.0
    %161 = vmatpush2.msra.mxu0 0.0
    %162 = vmatprep.subr.mxu0 0.0
    %163 = vmatpush2.msra.mxu0 0.0
    %164 = vmatprep.subr.mxu0 0.0
    %165 = vmatpush2.msra.mxu0 0.0
    %166 = vmatprep.subr.mxu0 0.0
    %167 = vmatpush2.msra.mxu0 0.0
    %168 = vmatprep.subr.mxu0 0.0
    %169 = vmatpush2.msra.mxu0 0.0
    %170 = vmatprep.subr.mxu0 0.0
    %171 = vmatpush2.msra.mxu0 0.0
    %172 = vmatprep.subr.mxu0 0.0
    %173 = vmatpush2.msra.mxu0 0.0
    %174 = vmatprep.subr.mxu0 0.0
    %175 = vmatpush2.msra.mxu0 0.0
    %176 = vmatprep.subr.mxu0 0.0
    %177 = vmatpush2.msra.mxu0 0.0
    %178 = vmatprep.subr.mxu0 0.0
    %179 = vmatpush2.msra.mxu0 0.0
    %180 = vmatprep.subr.mxu0 0.0
    %181 = vmatpush2.msra.mxu0 0.0
    %182 = vmatprep.subr.mxu0 0.0
    %183 = vmatpush2.msra.mxu0 0.0
    %184 = vmatprep.subr.mxu0 0.0
    %185 = vmatpush2.msra.mxu0 0.0
    %186 = vmatprep.subr.mxu0 0.0
    %187 = vmatpush2.msra.mxu0 0.0
    %188 = vmatprep.subr.mxu0 0.0
    %189 = vmatpush2.msra.mxu0 0.0
    %190 = vmatprep.mubr.f32.mxu0 0.0
    %191 = vmatmul.mubr.f32.gmra.mxu0 %v124
    %v192 = vpop.f32.mrf.mxu0
    %v193 = vadd.f32 %v120, %v192
    %v194 = vpop.f32.mrf.mxu0
    %195 = vdwg.mxu0
    %vm196 = vcmask 80896
    %197 = vst.msk [vmem:[#allocation2] sm:$0xff] %vm196, %v193
    // Predicated region
    $region22: #{pallas_ann_forward.1} parent=1 // pred_check
      _
    $region23: #{pallas_ann_forward.1} parent=1 // pred_check_branch
      %199 = sbr.rel (0) target = $region25
    $region24: #{pallas_ann_forward.1} parent=1 // pred_region
      %s201 = ssub.s32 128, 128
      %202 = vsyncadd [#allocation3], %s201
      %s204 = sshll.u32 [#allocation2], 4
      %s205 = int_to_ptr.vmem [resolvable:$true] %s204
      %207 = dma.vmem_to_hbm [thread:$0]  %s205, 128, %s5, [#allocation3]
    $region25: #{pallas_ann_forward.1} parent=1 // pred_fallthru
      _
    // Predicated region
    $region26: #{pallas_ann_forward.1} parent=1 // pred_check
      _
    $region27: #{pallas_ann_forward.1} parent=1 // pred_check_branch
      %209 = sbr.rel (0) target = $region29
    $region28: #{pallas_ann_forward.1} parent=1 // pred_region
      %210 = dma.done [#allocation3], 128
    $region29: #{pallas_ann_forward.1} parent=1 // pred_fallthru
      _
    %211 = vsyncpa [#allocation3], 1

</llo_original>
